<compile_context>
chip_gen: v5e
topology: v5e:2x2
jax: 0.10.0
libtpu: 0.0.40
codegen_flags: <defaults>
</compile_context>

<pallas_src>
import jax
import jax.numpy as jnp
from jax import lax
from jax.experimental import pallas as pl
from jax.experimental.pallas import tpu as pltpu

DROPOUT_P = 0.5
KEEP_PROB = 1.0 - DROPOUT_P
# keep element iff uint32 bits < KEEP_THRESHOLD  (P[keep] = KEEP_PROB)
KEEP_THRESHOLD = int(KEEP_PROB * 4294967296.0)  # 2**31 for p=0.5, fits uint32


def _fused_attnlike_kernel(x1_ref, x2_ref, x3_ref, bits_ref, o_ref):
    # ---- v1 = x1 @ x2^T : contract the minor (lane) axis of both operands,
    #      no explicit transpose / XLU pass needed. ----
    s = lax.dot_general(
        x1_ref[...],
        x2_ref[...],
        dimension_numbers=(((1,), (1,)), ((), ())),
        preferred_element_type=jnp.float32,
    )

    # ---- v2*softmax fused: softmax(0.5*s) == exp(0.5*(s - max(s))) / sum ----
    m = jnp.max(s, axis=-1, keepdims=True)
    e = jnp.exp((s - m) * 0.5)
    denom = jnp.sum(e, axis=-1, keepdims=True)

    # ---- dropout (training mode) fused with the softmax normalization:
    #      one per-row scale = (1/keep_prob) / sum, one select, one multiply ----
    keep = bits_ref[...] < jnp.uint32(KEEP_THRESHOLD)
    row_scale = (1.0 / KEEP_PROB) / denom            # (M, 1), tiny
    v4 = jnp.where(keep, e, 0.0) * row_scale

    # ---- v5 = v4 @ x3 ----
    o_ref[...] = jnp.dot(
        v4, x3_ref[...], preferred_element_type=jnp.float32
    ).astype(o_ref.dtype)


def fused_forward(x1, x2, x3, dropout_bits):
    M, K = x1.shape
    N, K2 = x2.shape
    N2, P = x3.shape
    assert K == K2 and N == N2 and dropout_bits.shape == (M, N)
    return pl.pallas_call(
        _fused_attnlike_kernel,
        out_shape=jax.ShapeDtypeStruct((M, P), jnp.float32),
        in_specs=[
            pl.BlockSpec(memory_space=pltpu.MemorySpace.VMEM),  # x1
            pl.BlockSpec(memory_space=pltpu.MemorySpace.VMEM),  # x2
            pl.BlockSpec(memory_space=pltpu.MemorySpace.VMEM),  # x3
            pl.BlockSpec(memory_space=pltpu.MemorySpace.VMEM),  # dropout bits
        ],
        out_specs=pl.BlockSpec(memory_space=pltpu.MemorySpace.VMEM),
    )(x1, x2, x3, dropout_bits)


if __name__ == "__main__":
    key = jax.random.PRNGKey(0)
    k1, k2, k3, k4 = jax.random.split(key, 4)

    # Small but (8,128)-aligned shapes: lane-dense loads/stores, full-lane
    # softmax reduction, unmasked MXU tiles.  x1:(M,K) x2:(N,K) x3:(N,P)
    M, K, N, P = 8, 128, 128, 128
    x1 = jax.random.normal(k1, (M, K), dtype=jnp.float32)
    x2 = jax.random.normal(k2, (N, K), dtype=jnp.float32)
    x3 = jax.random.normal(k3, (N, P), dtype=jnp.float32)
    # Dropout randomness sourced host-side (portable replacement for the
    # TPU-only stateful PRNG); thresholded inside the kernel.
    bits = jax.random.bits(k4, (M, N), dtype=jnp.uint32)

    out = fused_forward(x1, x2, x3, bits)
    jax.block_until_ready(out)
    assert out.shape == (M, P), out.shape
    assert bool(jnp.all(jnp.isfinite(out)))
    print("KERNEL_OK")
</pallas_src>

<mosaic_0001>
module attributes {stable_mosaic.version = 11 : i64} {
  func.func @_fused_attnlike_kernel(%arg0: memref<8x128xf32, #tpu.memory_space<vmem>>, %arg1: memref<128x128xf32, #tpu.memory_space<vmem>>, %arg2: memref<128x128xf32, #tpu.memory_space<vmem>>, %arg3: memref<8x128xi32, #tpu.memory_space<vmem>>, %arg4: memref<8x128xf32, #tpu.memory_space<vmem>>) attributes {dimension_semantics = [], scalar_prefetch = 0 : i64, scratch_operands = 0 : i64, tpu.core_type = #tpu.core_type<tc>} {
    %c0 = arith.constant 0 : index
    %c0_0 = arith.constant 0 : index
    %0 = vector.load %arg0[%c0, %c0_0] : memref<8x128xf32, #tpu.memory_space<vmem>>, vector<8x128xf32>
    %c0_1 = arith.constant 0 : index
    %c0_2 = arith.constant 0 : index
    %1 = vector.load %arg1[%c0_1, %c0_2] : memref<128x128xf32, #tpu.memory_space<vmem>>, vector<128x128xf32>
    %cst = arith.constant dense<0.000000e+00> : vector<8x128xf32>
    %2 = tpu.matmul %0, %1, %cst {dimension_numbers = #tpu.dot_dimension_numbers<[1], [1], [0], [0], [0, 0, 1, 0], [], []>} : vector<8x128xf32>, vector<128x128xf32>, vector<8x128xf32> -> vector<8x128xf32>
    %cst_3 = arith.constant dense<0xFF800000> : vector<8xf32>
    %3 = vector.multi_reduction <maximumf>, %2, %cst_3 [1] : vector<8x128xf32> to vector<8xf32>
    %4 = vector.shape_cast %3 : vector<8xf32> to vector<8x1xf32>
    %5 = vector.broadcast %4 : vector<8x1xf32> to vector<8x128xf32>
    %6 = arith.subf %2, %5 : vector<8x128xf32>
    %cst_4 = arith.constant 5.000000e-01 : f32
    %7 = vector.broadcast %cst_4 : f32 to vector<8x128xf32>
    %8 = arith.mulf %6, %7 : vector<8x128xf32>
    %9 = math.exp %8 : vector<8x128xf32>
    %cst_5 = arith.constant dense<0.000000e+00> : vector<8xf32>
    %10 = vector.multi_reduction <add>, %9, %cst_5 [1] : vector<8x128xf32> to vector<8xf32>
    %11 = vector.shape_cast %10 : vector<8xf32> to vector<8x1xf32>
    %c0_6 = arith.constant 0 : index
    %c0_7 = arith.constant 0 : index
    %12 = vector.load %arg3[%c0_6, %c0_7] : memref<8x128xi32, #tpu.memory_space<vmem>>, vector<8x128xi32>
    %c-2147483648_i32 = arith.constant -2147483648 : i32
    %13 = vector.broadcast %c-2147483648_i32 : i32 to vector<8x128xi32>
    %14 = arith.cmpi ult, %12, %13 : vector<8x128xi32>
    %cst_8 = arith.constant 2.000000e+00 : f32
    %15 = vector.broadcast %cst_8 : f32 to vector<8x1xf32>
    %16 = arith.divf %15, %11 : vector<8x1xf32>
    %cst_9 = arith.constant 0.000000e+00 : f32
    %17 = vector.broadcast %cst_9 : f32 to vector<8x128xf32>
    %18 = arith.select %14, %9, %17 : vector<8x128xi1>, vector<8x128xf32>
    %19 = vector.broadcast %16 : vector<8x1xf32> to vector<8x128xf32>
    %20 = arith.mulf %18, %19 : vector<8x128xf32>
    %c0_10 = arith.constant 0 : index
    %c0_11 = arith.constant 0 : index
    %21 = vector.load %arg2[%c0_10, %c0_11] : memref<128x128xf32, #tpu.memory_space<vmem>>, vector<128x128xf32>
    %cst_12 = arith.constant dense<0.000000e+00> : vector<8x128xf32>
    %22 = tpu.matmul %20, %21, %cst_12 {dimension_numbers = #tpu.dot_dimension_numbers<[1], [0], [0], [1], [0, 0, 1, 1], [], []>} : vector<8x128xf32>, vector<128x128xf32>, vector<8x128xf32> -> vector<8x128xf32>
    %c0_13 = arith.constant 0 : index
    %c0_14 = arith.constant 0 : index
    %23 = vector.load %arg4[%c0_13, %c0_14] : memref<8x128xf32, #tpu.memory_space<vmem>>, vector<8x128xf32>
    tpu.vector_store %arg4[%c0_13, %c0_14], %22 {strides = array<i32>} : memref<8x128xf32, #tpu.memory_space<vmem>>, vector<8x128xf32>,
    return
  }
}

</mosaic_0001>

<llo_original>
// kernel: tpu_custom_call.1
$region0: #{tpu_custom_call.1}
  #allocation0 [shape = 'u32[]', space=smem, size = 0x4, offset = 0x4, fixed_abs, tag = 'smem constant byte address 0x4 - core index']
  #allocation1 [shape = 'u32[72,128]{1,0:T(1,128)}', space=vmem, size = 0x9000, scoped, tag = 'internal scratch']
  %s0 = inlined_call_operand.hbm [shape: f32[8,128], index: 0, kind: input, shape index: {}]
  %s1 = inlined_call_operand.hbm [shape: f32[128,128], index: 1, kind: input, shape index: {}]
  %s2 = inlined_call_operand.hbm [shape: f32[128,128], index: 2, kind: input, shape index: {}]
  %s3 = inlined_call_operand.hbm [shape: u32[8,128], index: 3, kind: input, shape index: {}]
  %s4 = inlined_call_operand.hbm [shape: f32[8,128], index: 4, kind: output, shape index: {}]
  %s5 = sld [smem:[#allocation0]]
  $region42: #{tpu_custom_call.1} parent=0
    _
  %s7 = ssub.s32 1, %s5
  %s8 = scalar_select 0, %s7, %s5
  $region1: #{tpu_custom_call.1} parent=0
    #allocation2 [shape = 'u8[4096]{0}', space=vmem, size = 0x1000, scoped, tag = 'input window, operand 0, single buffered']
    #allocation3 [shape = 's32[1]{0}', space=sflag, size = 0x4, scoped, tag = 'scoped memory for tpu_custom_call.1']
    #allocation4 [shape = 's32[1]{0}', space=sflag, size = 0x4, scoped, tag = 'scoped memory for tpu_custom_call.1']
    #allocation5 [shape = 'u8[65536]{0}', space=vmem, size = 0x10000, scoped, tag = 'input window, operand 1, single buffered']
    #allocation6 [shape = 's32[1]{0}', space=sflag, size = 0x4, scoped, tag = 'scoped memory for tpu_custom_call.1']
    #allocation7 [shape = 'u8[65536]{0}', space=vmem, size = 0x10000, scoped, tag = 'input window, operand 2, single buffered']
    #allocation8 [shape = 'u8[4096]{0}', space=vmem, size = 0x1000, scoped, tag = 'input window, operand 3, single buffered']
    #allocation9 [shape = 's32[1]{0}', space=sflag, size = 0x4, scoped, tag = 'scoped memory for tpu_custom_call.1']
    #allocation10 [shape = 'u8[4096]{0}', space=vmem, size = 0x1000, scoped, tag = 'output window, operand 0, single buffered']
    %9 = vsyncpa [#allocation3], 0
    %10 = vsyncpa [#allocation6], 0
    %11 = vsyncpa [#allocation9], 0
    %12 = vsyncpa [#allocation4], 0
    // Predicated region
    $region2: #{tpu_custom_call.1} parent=1 // pred_check
      _
    $region3: #{tpu_custom_call.1} parent=1 // pred_check_branch
      %14 = sbr.rel (0) target = $region5
    $region4: #{tpu_custom_call.1} parent=1 // pred_region
      %16 = vsyncadd [#allocation3], 0
      %s18 = sshll.u32 %s0, 4
      %s19 = int_to_ptr.hbm [resolvable:$true] %s18
      %s20 = sshll.u32 [#allocation2], 4
      %s21 = int_to_ptr.vmem [resolvable:$true] %s20
      %23 = dma.hbm_to_vmem [thread:$0]  %s19, 128, %s21, [#allocation3]
    $region5: #{tpu_custom_call.1} parent=1 // pred_fallthru
      _
    // Predicated region
    $region6: #{tpu_custom_call.1} parent=1 // pred_check
      _
    $region7: #{tpu_custom_call.1} parent=1 // pred_check_branch
      %25 = sbr.rel (0) target = $region9
    $region8: #{tpu_custom_call.1} parent=1 // pred_region
      %27 = vsyncadd [#allocation6], 0
      %s28 = sshll.u32 %s1, 4
      %s29 = int_to_ptr.hbm [resolvable:$true] %s28
      %s30 = sshll.u32 [#allocation5], 4
      %s31 = int_to_ptr.vmem [resolvable:$true] %s30
      %36 = dma.hbm_to_vmem [thread:$0]  %s29, 2048, %s31, [#allocation6], 128, 128, 8
    $region9: #{tpu_custom_call.1} parent=1 // pred_fallthru
      _
    // Predicated region
    $region10: #{tpu_custom_call.1} parent=1 // pred_check
      _
    $region11: #{tpu_custom_call.1} parent=1 // pred_check_branch
      %38 = sbr.rel (0) target = $region13
    $region12: #{tpu_custom_call.1} parent=1 // pred_region
      %40 = vsyncadd [#allocation6], 0
      %s41 = sshll.u32 %s2, 4
      %s42 = int_to_ptr.hbm [resolvable:$true] %s41
      %s43 = sshll.u32 [#allocation7], 4
      %s44 = int_to_ptr.vmem [resolvable:$true] %s43
      %49 = dma.hbm_to_vmem [thread:$0]  %s42, 2048, %s44, [#allocation6], 128, 128, 8
    $region13: #{tpu_custom_call.1} parent=1 // pred_fallthru
      _
    // Predicated region
    $region14: #{tpu_custom_call.1} parent=1 // pred_check
      _
    $region15: #{tpu_custom_call.1} parent=1 // pred_check_branch
      %51 = sbr.rel (0) target = $region17
    $region16: #{tpu_custom_call.1} parent=1 // pred_region
      %53 = vsyncadd [#allocation9], 0
      %s55 = sshll.u32 %s3, 4
      %s56 = int_to_ptr.hbm [resolvable:$true] %s55
      %s57 = sshll.u32 [#allocation8], 4
      %s58 = int_to_ptr.vmem [resolvable:$true] %s57
      %60 = dma.hbm_to_vmem [thread:$0]  %s56, 128, %s58, [#allocation9]
    $region17: #{tpu_custom_call.1} parent=1 // pred_fallthru
      _
    // Predicated region
    $region18: #{tpu_custom_call.1} parent=1 // pred_check
      _
    $region19: #{tpu_custom_call.1} parent=1 // pred_check_branch
      %62 = sbr.rel (0) target = $region21
    $region20: #{tpu_custom_call.1} parent=1 // pred_region
      %64 = dma.done [#allocation3], 128
    $region21: #{tpu_custom_call.1} parent=1 // pred_fallthru
      _
    // Predicated region
    $region22: #{tpu_custom_call.1} parent=1 // pred_check
      _
    $region23: #{tpu_custom_call.1} parent=1 // pred_check_branch
      %66 = sbr.rel (0) target = $region25
    $region24: #{tpu_custom_call.1} parent=1 // pred_region
      %68 = dma.done [#allocation6], 2048
    $region25: #{tpu_custom_call.1} parent=1 // pred_fallthru
      _
    // Predicated region
    $region26: #{tpu_custom_call.1} parent=1 // pred_check
      _
    $region27: #{tpu_custom_call.1} parent=1 // pred_check_branch
      %70 = sbr.rel (0) target = $region29
    $region28: #{tpu_custom_call.1} parent=1 // pred_region
      %72 = dma.done [#allocation6], 2048
    $region29: #{tpu_custom_call.1} parent=1 // pred_fallthru
      _
    // Predicated region
    $region30: #{tpu_custom_call.1} parent=1 // pred_check
      _
    $region31: #{tpu_custom_call.1} parent=1 // pred_check_branch
      %74 = sbr.rel (0) target = $region33
    $region32: #{tpu_custom_call.1} parent=1 // pred_region
      %76 = dma.done [#allocation9], 128
    $region33: #{tpu_custom_call.1} parent=1 // pred_fallthru
      _
    %v77 = vld [vmem:[#allocation2] sm:$0xff]
    %v78 = vld [vmem:[#allocation5] sm:$0xff]
    %v79 = vld [vmem:[#allocation5 + $0x8] sm:$0xff]
    %v80 = vld [vmem:[#allocation5 + $0x10] sm:$0xff]
    %v81 = vld [vmem:[#allocation5 + $0x18] sm:$0xff]
    %v82 = vld [vmem:[#allocation5 + $0x20] sm:$0xff]
    %v83 = vld [vmem:[#allocation5 + $0x28] sm:$0xff]
    %v84 = vld [vmem:[#allocation5 + $0x30] sm:$0xff]
    %v85 = vld [vmem:[#allocation5 + $0x38] sm:$0xff]
    %v86 = vld [vmem:[#allocation5 + $0x40] sm:$0xff]
    %v87 = vld [vmem:[#allocation5 + $0x48] sm:$0xff]
    %v88 = vld [vmem:[#allocation5 + $0x50] sm:$0xff]
    %v89 = vld [vmem:[#allocation5 + $0x58] sm:$0xff]
    %v90 = vld [vmem:[#allocation5 + $0x60] sm:$0xff]
    %v91 = vld [vmem:[#allocation5 + $0x68] sm:$0xff]
    %v92 = vld [vmem:[#allocation5 + $0x70] sm:$0xff]
    %v93 = vld [vmem:[#allocation5 + $0x78] sm:$0xff]
    %94 = vmatpush.xpose.msra.mxu0 %v93
    %95 = vmatpush.xpose.msra.mxu0 %v92
    %96 = vmatpush.xpose.msra.mxu0 %v91
    %97 = vmatpush.xpose.msra.mxu0 %v90
    %98 = vmatpush.xpose.msra.mxu0 %v89
    %99 = vmatpush.xpose.msra.mxu0 %v88
    %100 = vmatpush.xpose.msra.mxu0 %v87
    %101 = vmatpush.xpose.msra.mxu0 %v86
    %102 = vmatpush.xpose.msra.mxu0 %v85
    %103 = vmatpush.xpose.msra.mxu0 %v84
    %104 = vmatpush.xpose.msra.mxu0 %v83
    %105 = vmatpush.xpose.msra.mxu0 %v82
    %106 = vmatpush.xpose.msra.mxu0 %v81
    %107 = vmatpush.xpose.msra.mxu0 %v80
    %108 = vmatpush.xpose.msra.mxu0 %v79
    %109 = vmatpush.xpose.msra.mxu0 %v78
    %110 = vmatmul.f32.gmra.mxu0 %v77
    %v111 = vpop.f32.mrf.mxu0
    %v112 = vadd.f32 0.0, %v111
    %113 = vdwg.mxu0
    %114 = vmax.xlane.f32.xlu0 %v112
    %v115 = vpop.xlane.xlu0 %114
    %v116 = vsub.f32 %v112, %v115
    %v117 = vmul.f32 %v116, 0.5
    %v118 = vmul.f32 %v117, 1.442695
    %v119 = vpow.pop %v118
    %120 = vadd.xlane.f32.xlu0 %v119
    %v121 = vpop.xlane.xlu0 %120
    %v122 = vld [vmem:[#allocation8] sm:$0xff]
    %v123 = vadd.s32 %v122, 2147483648
    %vm125 = vcmp.lt.s32.totalorder %v123, 0
    %v126 = vrcp.pop %v121
    %v127 = vmul.f32 %v121, %v126
    %v128 = vsub.f32 1.0, %v127
    %v129 = vmul.f32 %v126, %v128
    %v130 = vadd.f32 %v126, %v129
    %vm131 = vweird.f32 %v121
    %vm132 = vweird.f32 %v126
    %vm133 = vmor %vm131, %vm132
    %v134 = vsel %vm133, %v126, %v130
    %v135 = vand.u32 2147483647, %v121
    %vm136 = vcmp.eq.f32.partialorder %v135, 8.507059e+37
    %v137 = vand.u32 %v121, 2147483648
    %v138 = vor.u32 1.1754944e-38, %v137
    %v139 = vsel %vm136, %v138, %v134
    %v140 = vmul.f32 2.0, %v139
    %v141 = vsel %vm125, %v119, 0.0
    %v142 = vmul.f32 %v141, %v140
    %v143 = vld [vmem:[#allocation7] sm:$0xff]
    %v144 = vld [vmem:[#allocation7 + $0x8] sm:$0xff]
    %v145 = vld [vmem:[#allocation7 + $0x10] sm:$0xff]
    %v146 = vld [vmem:[#allocation7 + $0x18] sm:$0xff]
    %v147 = vld [vmem:[#allocation7 + $0x20] sm:$0xff]
    %v148 = vld [vmem:[#allocation7 + $0x28] sm:$0xff]
    %v149 = vld [vmem:[#allocation7 + $0x30] sm:$0xff]
    %v150 = vld [vmem:[#allocation7 + $0x38] sm:$0xff]
    %v151 = vld [vmem:[#allocation7 + $0x40] sm:$0xff]
    %v152 = vld [vmem:[#allocation7 + $0x48] sm:$0xff]
    %v153 = vld [vmem:[#allocation7 + $0x50] sm:$0xff]
    %v154 = vld [vmem:[#allocation7 + $0x58] sm:$0xff]
    %v155 = vld [vmem:[#allocation7 + $0x60] sm:$0xff]
    %v156 = vld [vmem:[#allocation7 + $0x68] sm:$0xff]
    %v157 = vld [vmem:[#allocation7 + $0x70] sm:$0xff]
    %v158 = vld [vmem:[#allocation7 + $0x78] sm:$0xff]
    %159 = vmatpush.msra.mxu0 %v158
    %160 = vmatpush.msra.mxu0 %v157
    %161 = vmatpush.msra.mxu0 %v156
    %162 = vmatpush.msra.mxu0 %v155
    %163 = vmatpush.msra.mxu0 %v154
    %164 = vmatpush.msra.mxu0 %v153
    %165 = vmatpush.msra.mxu0 %v152
    %166 = vmatpush.msra.mxu0 %v151
    %167 = vmatpush.msra.mxu0 %v150
    %168 = vmatpush.msra.mxu0 %v149
    %169 = vmatpush.msra.mxu0 %v148
    %170 = vmatpush.msra.mxu0 %v147
    %171 = vmatpush.msra.mxu0 %v146
    %172 = vmatpush.msra.mxu0 %v145
    %173 = vmatpush.msra.mxu0 %v144
    %174 = vmatpush.msra.mxu0 %v143
    %175 = vmatmul.f32.gmra.mxu0 %v142
    %v176 = vpop.f32.mrf.mxu0
    %v177 = vadd.f32 0.0, %v176
    %178 = vdwg.mxu0
    %179 = vst [vmem:[#allocation10] sm:$0xff] %v177
    // Predicated region
    $region34: #{tpu_custom_call.1} parent=1 // pred_check
      _
    $region35: #{tpu_custom_call.1} parent=1 // pred_check_branch
      %181 = sbr.rel (0) target = $region37
    $region36: #{tpu_custom_call.1} parent=1 // pred_region
      %183 = vsyncadd [#allocation4], 0
      %s185 = sshll.u32 [#allocation10], 4
      %s186 = int_to_ptr.vmem [resolvable:$true] %s185
      %s187 = sshll.u32 %s4, 4
      %s188 = int_to_ptr.hbm [resolvable:$true] %s187
      %190 = dma.vmem_to_hbm [thread:$0]  %s186, 128, %s188, [#allocation4]
    $region37: #{tpu_custom_call.1} parent=1 // pred_fallthru
      _
    // Predicated region
    $region38: #{tpu_custom_call.1} parent=1 // pred_check
      _
    $region39: #{tpu_custom_call.1} parent=1 // pred_check_branch
      %192 = sbr.rel (0) target = $region41
    $region40: #{tpu_custom_call.1} parent=1 // pred_region
      %194 = dma.done [#allocation4], 128
    $region41: #{tpu_custom_call.1} parent=1 // pred_fallthru
      _
    %195 = vsyncpa [#allocation3], 1
    %196 = vsyncpa [#allocation6], 1
    %197 = vsyncpa [#allocation9], 1
    %198 = vsyncpa [#allocation4], 1

</llo_original>
